<compile_context>
chip_gen: v5e
topology: v5e:2x2
jax: 0.10.0
libtpu: 0.0.40
codegen_flags: <defaults>
</compile_context>

<pallas_src>
import functools

import jax
import jax.numpy as jnp
from jax.experimental import pallas as pl
from jax.experimental.pallas import tpu as pltpu


def _round_up(x, m):
    return ((x + m - 1) // m) * m


def _choose_batch_tile(B, M, itemsize, *, vmem_budget_bytes=16 * 1024 * 1024,
                       max_tile=512):
    """Pick the batch tile (sized for v7x's 64 MiB VMEM per TensorCore).

    Per-batch-row VMEM bytes:
      - x tile, double-buffered:    2 * M * itemsize
      - out tile, double-buffered:  2 * M * itemsize
      - f32 layer-4 accumulator (pre output-cast): 4 * M
    Fixed cost: the resident w1/w4 blocks (double-buffered by the pipeline
    even though their index_map is constant).  Hidden activations
    ((tile, 20)/(tile, 10)) are negligible.
    """
    rnd = 16 if itemsize < 4 else 8          # bf16 sublane packing is (16, 128)
    per_row = 2 * M * itemsize + 2 * M * itemsize + 4 * M
    fixed = 2 * 2 * M * 20 * itemsize        # w1 + w4, double-buffered
    avail = max(vmem_budget_bytes - fixed, rnd * per_row)
    tile = max(rnd, (min(max_tile, avail // per_row) // rnd) * rnd)
    if tile >= B:
        # Whole batch in one block (block dim == full array dim is always
        # legal); never DMA/compute phantom rows for small batches.
        return B
    if B >= 4 * rnd:
        # Prefer >= 4 grid steps: hides the first/last DMA behind compute and
        # gives the v7x megacore load-balance slack on the "parallel" axis.
        tile = min(tile, max(rnd, _round_up(pl.cdiv(B, 4), rnd)))
    return tile


def sae_kernel(x_ref, w1_ref, b1_ref, w2_ref, b2_ref, w3_ref, b3_ref,
               w4_ref, b4_ref, out_ref):
    """Full SAE forward on one batch tile, entirely in VMEM.

    h1 = sigmoid(x  @ W1 + b1)   # (B, M)  -> (B, 20)
    h2 = sigmoid(h1 @ W2 + b2)   # (B, 20) -> (B, 10)
    h3 = sigmoid(h2 @ W3 + b3)   # (B, 10) -> (B, 20)
    y  =        h3 @ W4 + b4     # (B, 20) -> (B, M)

    Matmuls accumulate in f32 and sigmoids run in f32 (safe on v5e, which has
    no bf16 VPU/EUP); the tiny hidden activations are cast back to the weight
    dtype so the big layer-4 matmul uses the native MXU path.
    """
    wdt = w2_ref.dtype
    x = x_ref[...]
    h1 = jax.nn.sigmoid(
        jnp.dot(x, w1_ref[...], preferred_element_type=jnp.float32)
        + b1_ref[...]).astype(wdt)
    h2 = jax.nn.sigmoid(
        jnp.dot(h1, w2_ref[...], preferred_element_type=jnp.float32)
        + b2_ref[...]).astype(wdt)
    h3 = jax.nn.sigmoid(
        jnp.dot(h2, w3_ref[...], preferred_element_type=jnp.float32)
        + b3_ref[...]).astype(wdt)
    y = jnp.dot(h3, w4_ref[...], preferred_element_type=jnp.float32) + b4_ref[...]
    out_ref[...] = y.astype(out_ref.dtype)


@functools.partial(jax.jit, static_argnames=("batch_tile",))
def sae_forward(x, params, *, batch_tile=None):
    """SAE forward.  x: (B, nb_movies) in the dtype you want the kernel to run
    in (f32 or bf16).  params: output of init_sae_params / prepare_params
    (weights pre-transposed to (in, out), biases (1, out) kept in f32).

    No padding, casting, or slicing happens here — data goes straight into the
    pallas_call and comes straight out.
    """
    B, M = x.shape
    if batch_tile is None:
        batch_tile = _choose_batch_tile(B, M, jnp.dtype(x.dtype).itemsize)
    grid = (pl.cdiv(B, batch_tile),)

    # Weights/biases: full-array blocks with a constant index_map — the
    # pipeline keeps them VMEM-resident and does not re-fetch across steps.
    def full(shape):
        return pl.BlockSpec(shape, lambda i: (0,) * len(shape))

    # TODO(synk): for very large nb_movies, add an M grid axis (tile w1's
    # contraction with a pl.when-initialized f32 accumulator and w4's output
    # columns) so batch tiles stay large under v7x's 64 MiB VMEM, mark the
    # constant-index weight blocks pipeline_mode=pl.Buffered(1) to drop their
    # second pipeline buffer, and (v7x only) consider fp8 weight storage.

    out = pl.pallas_call(
        sae_kernel,
        out_shape=jax.ShapeDtypeStruct((B, M), x.dtype),
        grid_spec=pltpu.PrefetchScalarGridSpec(
            num_scalar_prefetch=0,
            grid=grid,
            in_specs=[
                pl.BlockSpec((batch_tile, M), lambda i: (i, 0)),   # x
                full(params["w1"].shape), full(params["b1"].shape),
                full(params["w2"].shape), full(params["b2"].shape),
                full(params["w3"].shape), full(params["b3"].shape),
                full(params["w4"].shape), full(params["b4"].shape),
            ],
            out_specs=pl.BlockSpec((batch_tile, M), lambda i: (i, 0)),
        ),
        compiler_params=pltpu.CompilerParams(
            dimension_semantics=("parallel",),
            vmem_limit_bytes=40 * 1024 * 1024,
        ),
    )(x, params["w1"], params["b1"], params["w2"], params["b2"],
      params["w3"], params["b3"], params["w4"], params["b4"])
    return out


def init_sae_params(key, nb_movies):
    """Deterministic PyTorch-style init: U(-1/sqrt(fan_in), 1/sqrt(fan_in)).

    nn.Linear stores W as (out, in); we store the transpose (in, out) so the
    kernel computes x @ W directly.  Biases are (1, out) rows (2-D broadcast).
    """
    dims = [(nb_movies, 20), (20, 10), (10, 20), (20, nb_movies)]
    params = {}
    for idx, (fan_in, fan_out) in enumerate(dims, start=1):
        key, kw, kb = jax.random.split(key, 3)
        bound = 1.0 / jnp.sqrt(fan_in)
        params[f"w{idx}"] = jax.random.uniform(
            kw, (fan_in, fan_out), jnp.float32, minval=-bound, maxval=bound)
        params[f"b{idx}"] = jax.random.uniform(
            kb, (1, fan_out), jnp.float32, minval=-bound, maxval=bound)
    return params


def prepare_params(params, dtype):
    """One-time weight cast — do this OUTSIDE the per-call path and reuse the
    result.  Biases stay f32 (matmuls accumulate in f32; sigmoids run in f32).
    """
    out = dict(params)
    for k in ("w1", "w2", "w3", "w4"):
        out[k] = params[k].astype(dtype)
    return out


def sae_reference(x, params):
    h = jax.nn.sigmoid(x @ params["w1"] + params["b1"])
    h = jax.nn.sigmoid(h @ params["w2"] + params["b2"])
    h = jax.nn.sigmoid(h @ params["w3"] + params["b3"])
    return h @ params["w4"] + params["b4"]


if __name__ == "__main__":
    # Small synthetic shapes. nb_movies=200 is deliberately NOT a multiple of
    # 128 and batch=50 is NOT a tile multiple, exercising the un-padded
    # feature axis and the ragged batch handling.
    nb_movies = 200
    batch = 50

    key = jax.random.PRNGKey(0)
    key, kx = jax.random.split(key)
    params = init_sae_params(key, nb_movies)
    # Ratings in [0, 5], many zeros like the SAE's sparse user-movie rows.
    x = jax.random.uniform(kx, (batch, nb_movies), jnp.float32, 0.0, 5.0)
    x = jnp.where(x < 3.5, 0.0, x)

    ref = sae_reference(x, params)

    # f32 path (single block over the whole small batch): exact match.
    out_f32 = jax.block_until_ready(sae_forward(x, params))
    assert out_f32.shape == (batch, nb_movies)
    assert jnp.allclose(out_f32, ref, atol=1e-5, rtol=1e-5)

    # Multi-step grid path with a partial tail block (50 rows, 16-row tiles):
    # Pallas masks the tail stores — no padding, no dropped rows.
    out_tiled = jax.block_until_ready(sae_forward(x, params, batch_tile=16))
    assert out_tiled.shape == (batch, nb_movies)
    assert jnp.allclose(out_tiled, ref, atol=1e-5, rtol=1e-5)

    # bf16 path: the caller already holds bf16 inputs/weights (cast ONCE here,
    # outside the forward), halving the kernel's HBM traffic.
    x_bf16 = x.astype(jnp.bfloat16)
    params_bf16 = prepare_params(params, jnp.bfloat16)
    out_bf16 = jax.block_until_ready(sae_forward(x_bf16, params_bf16))
    assert out_bf16.shape == (batch, nb_movies)
    assert jnp.allclose(out_bf16.astype(jnp.float32), ref, atol=5e-2, rtol=5e-2)

    print("KERNEL_OK")
</pallas_src>

<mosaic_0001>
module attributes {stable_mosaic.version = 11 : i64} {
  func.func @sae_kernel(%arg0: i32, %arg1: memref<50x200xf32, #tpu.memory_space<vmem>>, %arg2: memref<200x20xf32, #tpu.memory_space<vmem>>, %arg3: memref<1x20xf32, #tpu.memory_space<vmem>>, %arg4: memref<20x10xf32, #tpu.memory_space<vmem>>, %arg5: memref<1x10xf32, #tpu.memory_space<vmem>>, %arg6: memref<10x20xf32, #tpu.memory_space<vmem>>, %arg7: memref<1x20xf32, #tpu.memory_space<vmem>>, %arg8: memref<20x200xf32, #tpu.memory_space<vmem>>, %arg9: memref<1x200xf32, #tpu.memory_space<vmem>>, %arg10: memref<50x200xf32, #tpu.memory_space<vmem>>) attributes {dimension_semantics = [#tpu.dimension_semantics<parallel>], iteration_bounds = array<i64: 1>, scalar_prefetch = 0 : i64, scratch_operands = 0 : i64, tpu.core_type = #tpu.core_type<tc>, window_params = [{transform_indices = @transform_0, window_bounds = array<i64: 50, 200>}, {pipeline_mode = #tpu.pipeline_mode<synchronous>, transform_indices = @transform_1, window_bounds = array<i64: 200, 20>}, {pipeline_mode = #tpu.pipeline_mode<synchronous>, transform_indices = @transform_2, window_bounds = array<i64: 1, 20>}, {pipeline_mode = #tpu.pipeline_mode<synchronous>, transform_indices = @transform_3, window_bounds = array<i64: 20, 10>}, {pipeline_mode = #tpu.pipeline_mode<synchronous>, transform_indices = @transform_4, window_bounds = array<i64: 1, 10>}, {pipeline_mode = #tpu.pipeline_mode<synchronous>, transform_indices = @transform_5, window_bounds = array<i64: 10, 20>}, {pipeline_mode = #tpu.pipeline_mode<synchronous>, transform_indices = @transform_6, window_bounds = array<i64: 1, 20>}, {pipeline_mode = #tpu.pipeline_mode<synchronous>, transform_indices = @transform_7, window_bounds = array<i64: 20, 200>}, {pipeline_mode = #tpu.pipeline_mode<synchronous>, transform_indices = @transform_8, window_bounds = array<i64: 1, 200>}, {transform_indices = @transform_9, window_bounds = array<i64: 50, 200>}]} {
    %c0 = arith.constant 0 : index
    %c0_0 = arith.constant 0 : index
    %0 = vector.load %arg1[%c0, %c0_0] : memref<50x200xf32, #tpu.memory_space<vmem>>, vector<50x200xf32>
    %c0_1 = arith.constant 0 : index
    %c0_2 = arith.constant 0 : index
    %1 = vector.load %arg2[%c0_1, %c0_2] : memref<200x20xf32, #tpu.memory_space<vmem>>, vector<200x20xf32>
    %cst = arith.constant dense<0.000000e+00> : vector<50x20xf32>
    %2 = tpu.matmul %0, %1, %cst {dimension_numbers = #tpu.dot_dimension_numbers<[1], [0], [0], [1], [0, 0, 1, 1], [], []>} : vector<50x200xf32>, vector<200x20xf32>, vector<50x20xf32> -> vector<50x20xf32>
    %c0_3 = arith.constant 0 : index
    %c0_4 = arith.constant 0 : index
    %3 = vector.load %arg3[%c0_3, %c0_4] : memref<1x20xf32, #tpu.memory_space<vmem>>, vector<1x20xf32>
    %4 = vector.broadcast %3 : vector<1x20xf32> to vector<50x20xf32>
    %5 = arith.addf %2, %4 : vector<50x20xf32>
    %6 = arith.negf %5 : vector<50x20xf32>
    %7 = math.exp %6 : vector<50x20xf32>
    %cst_5 = arith.constant 1.000000e+00 : f32
    %8 = vector.broadcast %cst_5 : f32 to vector<50x20xf32>
    %9 = arith.addf %8, %7 : vector<50x20xf32>
    %10 = arith.divf %8, %9 : vector<50x20xf32>
    %c0_6 = arith.constant 0 : index
    %c0_7 = arith.constant 0 : index
    %11 = vector.load %arg4[%c0_6, %c0_7] : memref<20x10xf32, #tpu.memory_space<vmem>>, vector<20x10xf32>
    %cst_8 = arith.constant dense<0.000000e+00> : vector<50x10xf32>
    %12 = tpu.matmul %10, %11, %cst_8 {dimension_numbers = #tpu.dot_dimension_numbers<[1], [0], [0], [1], [0, 0, 1, 1], [], []>} : vector<50x20xf32>, vector<20x10xf32>, vector<50x10xf32> -> vector<50x10xf32>
    %c0_9 = arith.constant 0 : index
    %c0_10 = arith.constant 0 : index
    %13 = vector.load %arg5[%c0_9, %c0_10] : memref<1x10xf32, #tpu.memory_space<vmem>>, vector<1x10xf32>
    %14 = vector.broadcast %13 : vector<1x10xf32> to vector<50x10xf32>
    %15 = arith.addf %12, %14 : vector<50x10xf32>
    %16 = arith.negf %15 : vector<50x10xf32>
    %17 = math.exp %16 : vector<50x10xf32>
    %cst_11 = arith.constant 1.000000e+00 : f32
    %18 = vector.broadcast %cst_11 : f32 to vector<50x10xf32>
    %19 = arith.addf %18, %17 : vector<50x10xf32>
    %20 = arith.divf %18, %19 : vector<50x10xf32>
    %c0_12 = arith.constant 0 : index
    %c0_13 = arith.constant 0 : index
    %21 = vector.load %arg6[%c0_12, %c0_13] : memref<10x20xf32, #tpu.memory_space<vmem>>, vector<10x20xf32>
    %cst_14 = arith.constant dense<0.000000e+00> : vector<50x20xf32>
    %22 = tpu.matmul %20, %21, %cst_14 {dimension_numbers = #tpu.dot_dimension_numbers<[1], [0], [0], [1], [0, 0, 1, 1], [], []>} : vector<50x10xf32>, vector<10x20xf32>, vector<50x20xf32> -> vector<50x20xf32>
    %c0_15 = arith.constant 0 : index
    %c0_16 = arith.constant 0 : index
    %23 = vector.load %arg7[%c0_15, %c0_16] : memref<1x20xf32, #tpu.memory_space<vmem>>, vector<1x20xf32>
    %24 = vector.broadcast %23 : vector<1x20xf32> to vector<50x20xf32>
    %25 = arith.addf %22, %24 : vector<50x20xf32>
    %26 = arith.negf %25 : vector<50x20xf32>
    %27 = math.exp %26 : vector<50x20xf32>
    %cst_17 = arith.constant 1.000000e+00 : f32
    %28 = vector.broadcast %cst_17 : f32 to vector<50x20xf32>
    %29 = arith.addf %28, %27 : vector<50x20xf32>
    %30 = arith.divf %28, %29 : vector<50x20xf32>
    %c0_18 = arith.constant 0 : index
    %c0_19 = arith.constant 0 : index
    %31 = vector.load %arg8[%c0_18, %c0_19] : memref<20x200xf32, #tpu.memory_space<vmem>>, vector<20x200xf32>
    %cst_20 = arith.constant dense<0.000000e+00> : vector<50x200xf32>
    %32 = tpu.matmul %30, %31, %cst_20 {dimension_numbers = #tpu.dot_dimension_numbers<[1], [0], [0], [1], [0, 0, 1, 1], [], []>} : vector<50x20xf32>, vector<20x200xf32>, vector<50x200xf32> -> vector<50x200xf32>
    %c0_21 = arith.constant 0 : index
    %c0_22 = arith.constant 0 : index
    %33 = vector.load %arg9[%c0_21, %c0_22] : memref<1x200xf32, #tpu.memory_space<vmem>>, vector<1x200xf32>
    %34 = vector.broadcast %33 : vector<1x200xf32> to vector<50x200xf32>
    %35 = arith.addf %32, %34 : vector<50x200xf32>
    %c0_23 = arith.constant 0 : index
    %c0_24 = arith.constant 0 : index
    %36 = vector.load %arg10[%c0_23, %c0_24] : memref<50x200xf32, #tpu.memory_space<vmem>>, vector<50x200xf32>
    tpu.vector_store %arg10[%c0_23, %c0_24], %35 {strides = array<i32>} : memref<50x200xf32, #tpu.memory_space<vmem>>, vector<50x200xf32>,
    return
  }
  func.func @transform_0(%arg0: i32) -> (i32, i32) {
    %c0_i32 = arith.constant 0 : i32
    %c0_i32_0 = arith.constant 0 : i32
    return %arg0, %c0_i32 : i32, i32
  }
  func.func @transform_1(%arg0: i32) -> (i32, i32) {
    %c0_i32 = arith.constant 0 : i32
    %c0_i32_0 = arith.constant 0 : i32
    %c0_i32_1 = arith.constant 0 : i32
    return %c0_i32, %c0_i32_0 : i32, i32
  }
  func.func @transform_2(%arg0: i32) -> (i32, i32) {
    %c0_i32 = arith.constant 0 : i32
    %c0_i32_0 = arith.constant 0 : i32
    %c0_i32_1 = arith.constant 0 : i32
    return %c0_i32, %c0_i32_0 : i32, i32
  }
  func.func @transform_3(%arg0: i32) -> (i32, i32) {
    %c0_i32 = arith.constant 0 : i32
    %c0_i32_0 = arith.constant 0 : i32
    %c0_i32_1 = arith.constant 0 : i32
    return %c0_i32, %c0_i32_0 : i32, i32
  }
  func.func @transform_4(%arg0: i32) -> (i32, i32) {
    %c0_i32 = arith.constant 0 : i32
    %c0_i32_0 = arith.constant 0 : i32
    %c0_i32_1 = arith.constant 0 : i32
    return %c0_i32, %c0_i32_0 : i32, i32
  }
  func.func @transform_5(%arg0: i32) -> (i32, i32) {
    %c0_i32 = arith.constant 0 : i32
    %c0_i32_0 = arith.constant 0 : i32
    %c0_i32_1 = arith.constant 0 : i32
    return %c0_i32, %c0_i32_0 : i32, i32
  }
  func.func @transform_6(%arg0: i32) -> (i32, i32) {
    %c0_i32 = arith.constant 0 : i32
    %c0_i32_0 = arith.constant 0 : i32
    %c0_i32_1 = arith.constant 0 : i32
    return %c0_i32, %c0_i32_0 : i32, i32
  }
  func.func @transform_7(%arg0: i32) -> (i32, i32) {
    %c0_i32 = arith.constant 0 : i32
    %c0_i32_0 = arith.constant 0 : i32
    %c0_i32_1 = arith.constant 0 : i32
    return %c0_i32, %c0_i32_0 : i32, i32
  }
  func.func @transform_8(%arg0: i32) -> (i32, i32) {
    %c0_i32 = arith.constant 0 : i32
    %c0_i32_0 = arith.constant 0 : i32
    %c0_i32_1 = arith.constant 0 : i32
    return %c0_i32, %c0_i32_0 : i32, i32
  }
  func.func @transform_9(%arg0: i32) -> (i32, i32) {
    %c0_i32 = arith.constant 0 : i32
    %c0_i32_0 = arith.constant 0 : i32
    return %arg0, %c0_i32 : i32, i32
  }
}

</mosaic_0001>

<llo_original>
// kernel: sae_forward.1
$region0: #{sae_forward.1}
  #allocation0 [shape = 'u32[]', space=smem, size = 0x4, offset = 0x4, fixed_abs, tag = 'smem constant byte address 0x4 - core index']
  #allocation1 [shape = 'u32[72,128]{1,0:T(1,128)}', space=vmem, size = 0x9000, scoped, tag = 'internal scratch']
  %s0 = inlined_call_operand.vmem [shape: f32[50,200], index: 0, kind: input, shape index: {}]
  %s1 = inlined_call_operand.vmem [shape: f32[200,20], index: 1, kind: input, shape index: {}]
  %s2 = inlined_call_operand.vmem [shape: f32[1,20], index: 2, kind: input, shape index: {}]
  %s3 = inlined_call_operand.vmem [shape: f32[20,10], index: 3, kind: input, shape index: {}]
  %s4 = inlined_call_operand.vmem [shape: f32[1,10], index: 4, kind: input, shape index: {}]
  %s5 = inlined_call_operand.vmem [shape: f32[10,20], index: 5, kind: input, shape index: {}]
  %s6 = inlined_call_operand.vmem [shape: f32[1,20], index: 6, kind: input, shape index: {}]
  %s7 = inlined_call_operand.vmem [shape: f32[20,200], index: 7, kind: input, shape index: {}]
  %s8 = inlined_call_operand.vmem [shape: f32[1,200], index: 8, kind: input, shape index: {}]
  %s9 = inlined_call_operand.hbm [shape: f32[50,200], index: 9, kind: output, shape index: {}]
  %s10 = sld [smem:[#allocation0]]
  $region46: #{sae_forward.1} parent=0
    _
  %s12 = ssub.s32 1, %s10
  %s13 = scalar_select 0, %s12, %s10
  $region1: #{sae_forward.1} parent=0
    #allocation2 [shape = 'u8[57344]{0}', space=vmem, size = 0xe000, scoped, tag = 'output window, operand 0, single buffered']
    #allocation3 [shape = 's32[1]{0}', space=sflag, size = 0x4, scoped, tag = 'scoped memory for sae_forward.1']
    %14 = vsyncpa [#allocation3], 0
    // Predicated region
    $region2: #{sae_forward.1} parent=1 // pred_check
      _
    $region3: #{sae_forward.1} parent=1 // pred_check_branch
      %16 = sbr.rel (0) target = $region5
    $region4: #{sae_forward.1} parent=1 // pred_region
      _
    $region5: #{sae_forward.1} parent=1 // pred_fallthru
      _
    // Predicated region
    $region6: #{sae_forward.1} parent=1 // pred_check
      _
    $region7: #{sae_forward.1} parent=1 // pred_check_branch
      %18 = sbr.rel (0) target = $region9
    $region8: #{sae_forward.1} parent=1 // pred_region
      _
    $region9: #{sae_forward.1} parent=1 // pred_fallthru
      _
    // Predicated region
    $region10: #{sae_forward.1} parent=1 // pred_check
      _
    $region11: #{sae_forward.1} parent=1 // pred_check_branch
      %20 = sbr.rel (0) target = $region13
    $region12: #{sae_forward.1} parent=1 // pred_region
      _
    $region13: #{sae_forward.1} parent=1 // pred_fallthru
      _
    // Predicated region
    $region14: #{sae_forward.1} parent=1 // pred_check
      _
    $region15: #{sae_forward.1} parent=1 // pred_check_branch
      %22 = sbr.rel (0) target = $region17
    $region16: #{sae_forward.1} parent=1 // pred_region
      _
    $region17: #{sae_forward.1} parent=1 // pred_fallthru
      _
    // Predicated region
    $region18: #{sae_forward.1} parent=1 // pred_check
      _
    $region19: #{sae_forward.1} parent=1 // pred_check_branch
      %24 = sbr.rel (0) target = $region21
    $region20: #{sae_forward.1} parent=1 // pred_region
      _
    $region21: #{sae_forward.1} parent=1 // pred_fallthru
      _
    // Predicated region
    $region22: #{sae_forward.1} parent=1 // pred_check
      _
    $region23: #{sae_forward.1} parent=1 // pred_check_branch
      %26 = sbr.rel (0) target = $region25
    $region24: #{sae_forward.1} parent=1 // pred_region
      _
    $region25: #{sae_forward.1} parent=1 // pred_fallthru
      _
    // Predicated region
    $region26: #{sae_forward.1} parent=1 // pred_check
      _
    $region27: #{sae_forward.1} parent=1 // pred_check_branch
      %28 = sbr.rel (0) target = $region29
    $region28: #{sae_forward.1} parent=1 // pred_region
      _
    $region29: #{sae_forward.1} parent=1 // pred_fallthru
      _
    // Predicated region
    $region30: #{sae_forward.1} parent=1 // pred_check
      _
    $region31: #{sae_forward.1} parent=1 // pred_check_branch
      %30 = sbr.rel (0) target = $region33
    $region32: #{sae_forward.1} parent=1 // pred_region
      _
    $region33: #{sae_forward.1} parent=1 // pred_fallthru
      _
    // Predicated region
    $region34: #{sae_forward.1} parent=1 // pred_check
      _
    $region35: #{sae_forward.1} parent=1 // pred_check_branch
      %32 = sbr.rel (0) target = $region37
    $region36: #{sae_forward.1} parent=1 // pred_region
      _
    $region37: #{sae_forward.1} parent=1 // pred_fallthru
      _
    %v33 = vld [vmem:[%s0] sm:$0xff]
    %v34 = vld [vmem:[%s0 + $0x8] sm:$0xff]
    %v35 = vld [vmem:[%s0 + $0x10] sm:$0xff]
    %v36 = vld [vmem:[%s0 + $0x18] sm:$0xff]
    %v37 = vld [vmem:[%s0 + $0x20] sm:$0xff]
    %v38 = vld [vmem:[%s0 + $0x28] sm:$0xff]
    %v39 = vld [vmem:[%s0 + $0x30] sm:$0xff]
    %v40 = vld [vmem:[%s0 + $0x38] sm:$0xff]
    %v41 = vld [vmem:[%s0 + $0x40] sm:$0xff]
    %v42 = vld [vmem:[%s0 + $0x48] sm:$0xff]
    %v43 = vld [vmem:[%s0 + $0x50] sm:$0xff]
    %v44 = vld [vmem:[%s0 + $0x58] sm:$0xff]
    %v45 = vld [vmem:[%s0 + $0x60] sm:$0x3]
    %v46 = vld [vmem:[%s0 + $0x68] sm:$0x3]
    %v47 = vld [vmem:[%s1] sm:$0xff]
    %v48 = vld [vmem:[%s1 + $0x8] sm:$0xff]
    %v49 = vld [vmem:[%s1 + $0x10] sm:$0xff]
    %v50 = vld [vmem:[%s1 + $0x18] sm:$0xff]
    %v51 = vld [vmem:[%s1 + $0x20] sm:$0xff]
    %v52 = vld [vmem:[%s1 + $0x28] sm:$0xff]
    %v53 = vld [vmem:[%s1 + $0x30] sm:$0xff]
    %v54 = vld [vmem:[%s1 + $0x38] sm:$0xff]
    %v55 = vld [vmem:[%s1 + $0x40] sm:$0xff]
    %v56 = vld [vmem:[%s1 + $0x48] sm:$0xff]
    %v57 = vld [vmem:[%s1 + $0x50] sm:$0xff]
    %v58 = vld [vmem:[%s1 + $0x58] sm:$0xff]
    %v59 = vld [vmem:[%s1 + $0x60] sm:$0xff]
    %v60 = vld [vmem:[%s1 + $0x68] sm:$0xff]
    %v61 = vld [vmem:[%s1 + $0x70] sm:$0xff]
    %v62 = vld [vmem:[%s1 + $0x78] sm:$0xff]
    %v63 = vld [vmem:[%s1 + $0x80] sm:$0xff]
    %v64 = vld [vmem:[%s1 + $0x88] sm:$0xff]
    %v65 = vld [vmem:[%s1 + $0x90] sm:$0xff]
    %v66 = vld [vmem:[%s1 + $0x98] sm:$0xff]
    %v67 = vld [vmem:[%s1 + $0xa0] sm:$0xff]
    %v68 = vld [vmem:[%s1 + $0xa8] sm:$0xff]
    %v69 = vld [vmem:[%s1 + $0xb0] sm:$0xff]
    %v70 = vld [vmem:[%s1 + $0xb8] sm:$0xff]
    %v71 = vld [vmem:[%s1 + $0xc0] sm:$0xff]
    %v72 = vld [vmem:[%s2] sm:$0x1]
    %v74 = vperm.slane %v72, 0
    %vm76 = vcmask 588800
    %v78 = vsel %vm76, %v34, 0
    %v81 = vsel %vm76, %v36, 0
    %v84 = vsel %vm76, %v38, 0
    %v87 = vsel %vm76, %v40, 0
    %v90 = vsel %vm76, %v42, 0
    %v93 = vsel %vm76, %v44, 0
    %v96 = vsel %vm76, %v46, 0
    %98 = vmatpush.msra.mxu0 %v62
    %99 = vmatpush.msra.mxu0 %v61
    %100 = vmatpush.msra.mxu0 %v60
    %101 = vmatpush.msra.mxu0 %v59
    %102 = vmatpush.msra.mxu0 %v58
    %103 = vmatpush.msra.mxu0 %v57
    %104 = vmatpush.msra.mxu0 %v56
    %105 = vmatpush.msra.mxu0 %v55
    %106 = vmatpush.msra.mxu0 %v54
    %107 = vmatpush.msra.mxu0 %v53
    %108 = vmatpush.msra.mxu0 %v52
    %109 = vmatpush.msra.mxu0 %v51
    %110 = vmatpush.msra.mxu0 %v50
    %111 = vmatpush.msra.mxu0 %v49
    %112 = vmatpush.msra.mxu0 %v48
    %113 = vmatpush.msra.mxu0 %v47
    %114 = vmatmul.f32.gmra.mxu0 %v33
    %v115 = vpop.f32.mrf.mxu0
    %v116 = vadd.f32 %v74, %v115
    %117 = vmatmul.f32.gmra.mxu0 %v35
    %v118 = vpop.f32.mrf.mxu0
    %v119 = vadd.f32 %v74, %v118
    %120 = vmatmul.f32.gmra.mxu0 %v37
    %v121 = vpop.f32.mrf.mxu0
    %v122 = vadd.f32 %v74, %v121
    %123 = vmatmul.f32.gmra.mxu0 %v39
    %v124 = vpop.f32.mrf.mxu0
    %v125 = vadd.f32 %v74, %v124
    %126 = vmatmul.f32.gmra.mxu0 %v41
    %v127 = vpop.f32.mrf.mxu0
    %v128 = vadd.f32 %v74, %v127
    %129 = vmatmul.f32.gmra.mxu0 %v43
    %v130 = vpop.f32.mrf.mxu0
    %v131 = vadd.f32 %v74, %v130
    %132 = vmatmul.f32.gmra.mxu0 %v45
    %v133 = vpop.f32.mrf.mxu0
    %v134 = vadd.f32 %v74, %v133
    %135 = vdwg.mxu0
    %136 = vmatpush.msra.mxu0 0.0
    %137 = vmatpush.msra.mxu0 0.0
    %138 = vmatpush.msra.mxu0 0.0
    %139 = vmatpush.msra.mxu0 0.0
    %140 = vmatpush.msra.mxu0 0.0
    %141 = vmatpush.msra.mxu0 0.0
    %142 = vmatpush.msra.mxu0 0.0
    %143 = vmatpush.msra.mxu0 %v71
    %144 = vmatpush.msra.mxu0 %v70
    %145 = vmatpush.msra.mxu0 %v69
    %146 = vmatpush.msra.mxu0 %v68
    %147 = vmatpush.msra.mxu0 %v67
    %148 = vmatpush.msra.mxu0 %v66
    %149 = vmatpush.msra.mxu0 %v65
    %150 = vmatpush.msra.mxu0 %v64
    %151 = vmatpush.msra.mxu0 %v63
    %152 = vmatmul.f32.gmra.mxu0 %v78
    %v153 = vpop.f32.mrf.mxu0
    %v154 = vadd.f32 %v116, %v153
    %155 = vmatmul.f32.gmra.mxu0 %v81
    %v156 = vpop.f32.mrf.mxu0
    %v157 = vadd.f32 %v119, %v156
    %158 = vmatmul.f32.gmra.mxu0 %v84
    %v159 = vpop.f32.mrf.mxu0
    %v160 = vadd.f32 %v122, %v159
    %161 = vmatmul.f32.gmra.mxu0 %v87
    %v162 = vpop.f32.mrf.mxu0
    %v163 = vadd.f32 %v125, %v162
    %164 = vmatmul.f32.gmra.mxu0 %v90
    %v165 = vpop.f32.mrf.mxu0
    %v166 = vadd.f32 %v128, %v165
    %167 = vmatmul.f32.gmra.mxu0 %v93
    %v168 = vpop.f32.mrf.mxu0
    %v169 = vadd.f32 %v131, %v168
    %170 = vmatmul.f32.gmra.mxu0 %v96
    %v171 = vpop.f32.mrf.mxu0
    %v172 = vadd.f32 %v134, %v171
    %173 = vdwg.mxu0
    %v174 = vxor.u32 %v154, 2147483648
    %v175 = vxor.u32 %v157, 2147483648
    %v176 = vxor.u32 %v160, 2147483648
    %v177 = vxor.u32 %v163, 2147483648
    %v178 = vxor.u32 %v166, 2147483648
    %v179 = vxor.u32 %v169, 2147483648
    %v180 = vxor.u32 %v172, 2147483648
    %v181 = vmul.f32 %v174, 1.442695
    %v182 = vpow.pop %v181
    %v183 = vmul.f32 %v175, 1.442695
    %v184 = vpow.pop %v183
    %v185 = vmul.f32 %v176, 1.442695
    %v186 = vpow.pop %v185
    %v187 = vmul.f32 %v177, 1.442695
    %v188 = vpow.pop %v187
    %v189 = vmul.f32 %v178, 1.442695
    %v190 = vpow.pop %v189
    %v191 = vmul.f32 %v179, 1.442695
    %v192 = vpow.pop %v191
    %v193 = vmul.f32 %v180, 1.442695
    %v194 = vpow.pop %v193
    %v195 = vadd.f32 %v182, 1.0
    %v196 = vadd.f32 %v184, 1.0
    %v197 = vadd.f32 %v186, 1.0
    %v198 = vadd.f32 %v188, 1.0
    %v199 = vadd.f32 %v190, 1.0
    %v200 = vadd.f32 %v192, 1.0
    %v201 = vadd.f32 %v194, 1.0
    %v202 = vrcp.pop %v195
    %v203 = vmul.f32 %v195, %v202
    %v204 = vsub.f32 1.0, %v203
    %v205 = vmul.f32 %v202, %v204
    %v206 = vadd.f32 %v202, %v205
    %vm207 = vweird.f32 %v195
    %vm208 = vweird.f32 %v202
    %vm209 = vmor %vm207, %vm208
    %v210 = vsel %vm209, %v202, %v206
    %v211 = vand.u32 2147483647, %v195
    %vm212 = vcmp.eq.f32.partialorder %v211, 8.507059e+37
    %v213 = vand.u32 %v195, 2147483648
    %v214 = vor.u32 1.1754944e-38, %v213
    %v215 = vsel %vm212, %v214, %v210
    %v216 = vmul.f32 1.0, %v215
    %v217 = vrcp.pop %v196
    %v218 = vmul.f32 %v196, %v217
    %v219 = vsub.f32 1.0, %v218
    %v220 = vmul.f32 %v217, %v219
    %v221 = vadd.f32 %v217, %v220
    %vm222 = vweird.f32 %v196
    %vm223 = vweird.f32 %v217
    %vm224 = vmor %vm222, %vm223
    %v225 = vsel %vm224, %v217, %v221
    %v226 = vand.u32 2147483647, %v196
    %vm227 = vcmp.eq.f32.partialorder %v226, 8.507059e+37
    %v228 = vand.u32 %v196, 2147483648
    %v229 = vor.u32 1.1754944e-38, %v228
    %v230 = vsel %vm227, %v229, %v225
    %v231 = vmul.f32 1.0, %v230
    %v232 = vrcp.pop %v197
    %v233 = vmul.f32 %v197, %v232
    %v234 = vsub.f32 1.0, %v233
    %v235 = vmul.f32 %v232, %v234
    %v236 = vadd.f32 %v232, %v235
    %vm237 = vweird.f32 %v197
    %vm238 = vweird.f32 %v232
    %vm239 = vmor %vm237, %vm238
    %v240 = vsel %vm239, %v232, %v236
    %v241 = vand.u32 2147483647, %v197
    %vm242 = vcmp.eq.f32.partialorder %v241, 8.507059e+37
    %v243 = vand.u32 %v197, 2147483648
    %v244 = vor.u32 1.1754944e-38, %v243
    %v245 = vsel %vm242, %v244, %v240
    %v246 = vmul.f32 1.0, %v245
    %v247 = vrcp.pop %v198
    %v248 = vmul.f32 %v198, %v247
    %v249 = vsub.f32 1.0, %v248
    %v250 = vmul.f32 %v247, %v249
    %v251 = vadd.f32 %v247, %v250
    %vm252 = vweird.f32 %v198
    %vm253 = vweird.f32 %v247
    %vm254 = vmor %vm252, %vm253
    %v255 = vsel %vm254, %v247, %v251
    %v256 = vand.u32 2147483647, %v198
    %vm257 = vcmp.eq.f32.partialorder %v256, 8.507059e+37
    %v258 = vand.u32 %v198, 2147483648
    %v259 = vor.u32 1.1754944e-38, %v258
    %v260 = vsel %vm257, %v259, %v255
    %v261 = vmul.f32 1.0, %v260
    %v262 = vrcp.pop %v199
    %v263 = vmul.f32 %v199, %v262
    %v264 = vsub.f32 1.0, %v263
    %v265 = vmul.f32 %v262, %v264
    %v266 = vadd.f32 %v262, %v265
    %vm267 = vweird.f32 %v199
    %vm268 = vweird.f32 %v262
    %vm269 = vmor %vm267, %vm268
    %v270 = vsel %vm269, %v262, %v266
    %v271 = vand.u32 2147483647, %v199
    %vm272 = vcmp.eq.f32.partialorder %v271, 8.507059e+37
    %v273 = vand.u32 %v199, 2147483648
    %v274 = vor.u32 1.1754944e-38, %v273
    %v275 = vsel %vm272, %v274, %v270
    %v276 = vmul.f32 1.0, %v275
    %v277 = vrcp.pop %v200
    %v278 = vmul.f32 %v200, %v277
    %v279 = vsub.f32 1.0, %v278
    %v280 = vmul.f32 %v277, %v279
    %v281 = vadd.f32 %v277, %v280
    %vm282 = vweird.f32 %v200
    %vm283 = vweird.f32 %v277
    %vm284 = vmor %vm282, %vm283
    %v285 = vsel %vm284, %v277, %v281
    %v286 = vand.u32 2147483647, %v200
    %vm287 = vcmp.eq.f32.partialorder %v286, 8.507059e+37
    %v288 = vand.u32 %v200, 2147483648
    %v289 = vor.u32 1.1754944e-38, %v288
    %v290 = vsel %vm287, %v289, %v285
    %v291 = vmul.f32 1.0, %v290
    %v292 = vrcp.pop %v201
    %v293 = vmul.f32 %v201, %v292
    %v294 = vsub.f32 1.0, %v293
    %v295 = vmul.f32 %v292, %v294
    %v296 = vadd.f32 %v292, %v295
    %vm297 = vweird.f32 %v201
    %vm298 = vweird.f32 %v292
    %vm299 = vmor %vm297, %vm298
    %v300 = vsel %vm299, %v292, %v296
    %v301 = vand.u32 2147483647, %v201
    %vm302 = vcmp.eq.f32.partialorder %v301, 8.507059e+37
    %v303 = vand.u32 %v201, 2147483648
    %v304 = vor.u32 1.1754944e-38, %v303
    %v305 = vsel %vm302, %v304, %v300
    %v306 = vmul.f32 1.0, %v305
    %v307 = vld [vmem:[%s3] sm:$0xff]
    %v308 = vld [vmem:[%s3 + $0x8] sm:$0xff]
    %v309 = vld [vmem:[%s3 + $0x10] sm:$0xf]
    %v310 = vld [vmem:[%s4] sm:$0x1]
    %v312 = vperm.slane %v310, 0
    %vm314 = vcmask 162816
    %v316 = vsel %vm314, %v216, 0
    %v319 = vsel %vm314, %v231, 0
    %v322 = vsel %vm314, %v246, 0
    %v325 = vsel %vm314, %v261, 0
    %v328 = vsel %vm314, %v276, 0
    %v331 = vsel %vm314, %v291, 0
    %v334 = vsel %vm314, %v306, 0
    %vm336 = vcmask 1043456
    %v338 = vsel %vm336, %v309, 0
    %340 = vmatpush.msra.mxu0 0.0
    %341 = vmatpush.msra.mxu0 0.0
    %342 = vmatpush.msra.mxu0 0.0
    %343 = vmatpush.msra.mxu0 0.0
    %344 = vmatpush.msra.mxu0 0.0
    %345 = vmatpush.msra.mxu0 0.0
    %346 = vmatpush.msra.mxu0 0.0
    %347 = vmatpush.msra.mxu0 0.0
    %348 = vmatpush.msra.mxu0 0.0
    %349 = vmatpush.msra.mxu0 0.0
    %350 = vmatpush.msra.mxu0 0.0
    %351 = vmatpush.msra.mxu0 0.0
    %352 = vmatpush.msra.mxu0 0.0
    %353 = vmatpush.msra.mxu0 %v338
    %354 = vmatpush.msra.mxu0 %v308
    %355 = vmatpush.msra.mxu0 %v307
    %356 = vmatmul.f32.gmra.mxu0 %v316
    %v357 = vpop.f32.mrf.mxu0
    %v358 = vadd.f32 %v312, %v357
    %359 = vmatmul.f32.gmra.mxu0 %v319
    %v360 = vpop.f32.mrf.mxu0
    %v361 = vadd.f32 %v312, %v360
    %362 = vmatmul.f32.gmra.mxu0 %v322
    %v363 = vpop.f32.mrf.mxu0
    %v364 = vadd.f32 %v312, %v363
    %365 = vmatmul.f32.gmra.mxu0 %v325
    %v366 = vpop.f32.mrf.mxu0
    %v367 = vadd.f32 %v312, %v366
    %368 = vmatmul.f32.gmra.mxu0 %v328
    %v369 = vpop.f32.mrf.mxu0
    %v370 = vadd.f32 %v312, %v369
    %371 = vmatmul.f32.gmra.mxu0 %v331
    %v372 = vpop.f32.mrf.mxu0
    %v373 = vadd.f32 %v312, %v372
    %374 = vmatmul.f32.gmra.mxu0 %v334
    %v375 = vpop.f32.mrf.mxu0
    %v376 = vadd.f32 %v312, %v375
    %377 = vdwg.mxu0
    %v378 = vxor.u32 %v358, 2147483648
    %v379 = vxor.u32 %v361, 2147483648
    %v380 = vxor.u32 %v364, 2147483648
    %v381 = vxor.u32 %v367, 2147483648
    %v382 = vxor.u32 %v370, 2147483648
    %v383 = vxor.u32 %v373, 2147483648
    %v384 = vxor.u32 %v376, 2147483648
    %v385 = vmul.f32 %v378, 1.442695
    %v386 = vpow.pop %v385
    %v387 = vmul.f32 %v379, 1.442695
    %v388 = vpow.pop %v387
    %v389 = vmul.f32 %v380, 1.442695
    %v390 = vpow.pop %v389
    %v391 = vmul.f32 %v381, 1.442695
    %v392 = vpow.pop %v391
    %v393 = vmul.f32 %v382, 1.442695
    %v394 = vpow.pop %v393
    %v395 = vmul.f32 %v383, 1.442695
    %v396 = vpow.pop %v395
    %v397 = vmul.f32 %v384, 1.442695
    %v398 = vpow.pop %v397
    %v399 = vadd.f32 %v386, 1.0
    %v400 = vadd.f32 %v388, 1.0
    %v401 = vadd.f32 %v390, 1.0
    %v402 = vadd.f32 %v392, 1.0
    %v403 = vadd.f32 %v394, 1.0
    %v404 = vadd.f32 %v396, 1.0
    %v405 = vadd.f32 %v398, 1.0
    %v406 = vrcp.pop %v399
    %v407 = vmul.f32 %v399, %v406
    %v408 = vsub.f32 1.0, %v407
    %v409 = vmul.f32 %v406, %v408
    %v410 = vadd.f32 %v406, %v409
    %vm411 = vweird.f32 %v399
    %vm412 = vweird.f32 %v406
    %vm413 = vmor %vm411, %vm412
    %v414 = vsel %vm413, %v406, %v410
    %v415 = vand.u32 2147483647, %v399
    %vm416 = vcmp.eq.f32.partialorder %v415, 8.507059e+37
    %v417 = vand.u32 %v399, 2147483648
    %v418 = vor.u32 1.1754944e-38, %v417
    %v419 = vsel %vm416, %v418, %v414
    %v420 = vmul.f32 1.0, %v419
    %v421 = vrcp.pop %v400
    %v422 = vmul.f32 %v400, %v421
    %v423 = vsub.f32 1.0, %v422
    %v424 = vmul.f32 %v421, %v423
    %v425 = vadd.f32 %v421, %v424
    %vm426 = vweird.f32 %v400
    %vm427 = vweird.f32 %v421
    %vm428 = vmor %vm426, %vm427
    %v429 = vsel %vm428, %v421, %v425
    %v430 = vand.u32 2147483647, %v400
    %vm431 = vcmp.eq.f32.partialorder %v430, 8.507059e+37
    %v432 = vand.u32 %v400, 2147483648
    %v433 = vor.u32 1.1754944e-38, %v432
    %v434 = vsel %vm431, %v433, %v429
    %v435 = vmul.f32 1.0, %v434
    %v436 = vrcp.pop %v401
    %v437 = vmul.f32 %v401, %v436
    %v438 = vsub.f32 1.0, %v437
    %v439 = vmul.f32 %v436, %v438
    %v440 = vadd.f32 %v436, %v439
    %vm441 = vweird.f32 %v401
    %vm442 = vweird.f32 %v436
    %vm443 = vmor %vm441, %vm442
    %v444 = vsel %vm443, %v436, %v440
    %v445 = vand.u32 2147483647, %v401
    %vm446 = vcmp.eq.f32.partialorder %v445, 8.507059e+37
    %v447 = vand.u32 %v401, 2147483648
    %v448 = vor.u32 1.1754944e-38, %v447
    %v449 = vsel %vm446, %v448, %v444
    %v450 = vmul.f32 1.0, %v449
    %v451 = vrcp.pop %v402
    %v452 = vmul.f32 %v402, %v451
    %v453 = vsub.f32 1.0, %v452
    %v454 = vmul.f32 %v451, %v453
    %v455 = vadd.f32 %v451, %v454
    %vm456 = vweird.f32 %v402
    %vm457 = vweird.f32 %v451
    %vm458 = vmor %vm456, %vm457
    %v459 = vsel %vm458, %v451, %v455
    %v460 = vand.u32 2147483647, %v402
    %vm461 = vcmp.eq.f32.partialorder %v460, 8.507059e+37
    %v462 = vand.u32 %v402, 2147483648
    %v463 = vor.u32 1.1754944e-38, %v462
    %v464 = vsel %vm461, %v463, %v459
    %v465 = vmul.f32 1.0, %v464
    %v466 = vrcp.pop %v403
    %v467 = vmul.f32 %v403, %v466
    %v468 = vsub.f32 1.0, %v467
    %v469 = vmul.f32 %v466, %v468
    %v470 = vadd.f32 %v466, %v469
    %vm471 = vweird.f32 %v403
    %vm472 = vweird.f32 %v466
    %vm473 = vmor %vm471, %vm472
    %v474 = vsel %vm473, %v466, %v470
    %v475 = vand.u32 2147483647, %v403
    %vm476 = vcmp.eq.f32.partialorder %v475, 8.507059e+37
    %v477 = vand.u32 %v403, 2147483648
    %v478 = vor.u32 1.1754944e-38, %v477
    %v479 = vsel %vm476, %v478, %v474
    %v480 = vmul.f32 1.0, %v479
    %v481 = vrcp.pop %v404
    %v482 = vmul.f32 %v404, %v481
    %v483 = vsub.f32 1.0, %v482
    %v484 = vmul.f32 %v481, %v483
    %v485 = vadd.f32 %v481, %v484
    %vm486 = vweird.f32 %v404
    %vm487 = vweird.f32 %v481
    %vm488 = vmor %vm486, %vm487
    %v489 = vsel %vm488, %v481, %v485
    %v490 = vand.u32 2147483647, %v404
    %vm491 = vcmp.eq.f32.partialorder %v490, 8.507059e+37
    %v492 = vand.u32 %v404, 2147483648
    %v493 = vor.u32 1.1754944e-38, %v492
    %v494 = vsel %vm491, %v493, %v489
    %v495 = vmul.f32 1.0, %v494
    %v496 = vrcp.pop %v405
    %v497 = vmul.f32 %v405, %v496
    %v498 = vsub.f32 1.0, %v497
    %v499 = vmul.f32 %v496, %v498
    %v500 = vadd.f32 %v496, %v499
    %vm501 = vweird.f32 %v405
    %vm502 = vweird.f32 %v496
    %vm503 = vmor %vm501, %vm502
    %v504 = vsel %vm503, %v496, %v500
    %v505 = vand.u32 2147483647, %v405
    %vm506 = vcmp.eq.f32.partialorder %v505, 8.507059e+37
    %v507 = vand.u32 %v405, 2147483648
    %v508 = vor.u32 1.1754944e-38, %v507
    %v509 = vsel %vm506, %v508, %v504
    %v510 = vmul.f32 1.0, %v509
    %v511 = vld [vmem:[%s5] sm:$0xff]
    %v512 = vld [vmem:[%s5 + $0x8] sm:$0x3]
    %v513 = vld [vmem:[%s6] sm:$0x1]
    %v515 = vperm.slane %v513, 0
    %vm517 = vcmask 80896
    %v519 = vsel %vm517, %v420, 0
    %v522 = vsel %vm517, %v435, 0
    %v525 = vsel %vm517, %v450, 0
    %v528 = vsel %vm517, %v465, 0
    %v531 = vsel %vm517, %v480, 0
    %v534 = vsel %vm517, %v495, 0
    %v537 = vsel %vm517, %v510, 0
    %vm539 = vcmask 1041408
    %v541 = vsel %vm539, %v512, 0
    %543 = vmatpush.msra.mxu0 0.0
    %544 = vmatpush.msra.mxu0 0.0
    %545 = vmatpush.msra.mxu0 0.0
    %546 = vmatpush.msra.mxu0 0.0
    %547 = vmatpush.msra.mxu0 0.0
    %548 = vmatpush.msra.mxu0 0.0
    %549 = vmatpush.msra.mxu0 0.0
    %550 = vmatpush.msra.mxu0 0.0
    %551 = vmatpush.msra.mxu0 0.0
    %552 = vmatpush.msra.mxu0 0.0
    %553 = vmatpush.msra.mxu0 0.0
    %554 = vmatpush.msra.mxu0 0.0
    %555 = vmatpush.msra.mxu0 0.0
    %556 = vmatpush.msra.mxu0 0.0
    %557 = vmatpush.msra.mxu0 %v541
    %558 = vmatpush.msra.mxu0 %v511
    %559 = vmatmul.f32.gmra.mxu0 %v519
    %v560 = vpop.f32.mrf.mxu0
    %v561 = vadd.f32 %v515, %v560
    %562 = vmatmul.f32.gmra.mxu0 %v522
    %v563 = vpop.f32.mrf.mxu0
    %v564 = vadd.f32 %v515, %v563
    %565 = vmatmul.f32.gmra.mxu0 %v525
    %v566 = vpop.f32.mrf.mxu0
    %v567 = vadd.f32 %v515, %v566
    %568 = vmatmul.f32.gmra.mxu0 %v528
    %v569 = vpop.f32.mrf.mxu0
    %v570 = vadd.f32 %v515, %v569
    %571 = vmatmul.f32.gmra.mxu0 %v531
    %v572 = vpop.f32.mrf.mxu0
    %v573 = vadd.f32 %v515, %v572
    %574 = vmatmul.f32.gmra.mxu0 %v534
    %v575 = vpop.f32.mrf.mxu0
    %v576 = vadd.f32 %v515, %v575
    %577 = vmatmul.f32.gmra.mxu0 %v537
    %v578 = vpop.f32.mrf.mxu0
    %v579 = vadd.f32 %v515, %v578
    %580 = vdwg.mxu0
    %v581 = vxor.u32 %v561, 2147483648
    %v582 = vxor.u32 %v564, 2147483648
    %v583 = vxor.u32 %v567, 2147483648
    %v584 = vxor.u32 %v570, 2147483648
    %v585 = vxor.u32 %v573, 2147483648
    %v586 = vxor.u32 %v576, 2147483648
    %v587 = vxor.u32 %v579, 2147483648
    %v588 = vmul.f32 %v581, 1.442695
    %v589 = vpow.pop %v588
    %v590 = vmul.f32 %v582, 1.442695
    %v591 = vpow.pop %v590
    %v592 = vmul.f32 %v583, 1.442695
    %v593 = vpow.pop %v592
    %v594 = vmul.f32 %v584, 1.442695
    %v595 = vpow.pop %v594
    %v596 = vmul.f32 %v585, 1.442695
    %v597 = vpow.pop %v596
    %v598 = vmul.f32 %v586, 1.442695
    %v599 = vpow.pop %v598
    %v600 = vmul.f32 %v587, 1.442695
    %v601 = vpow.pop %v600
    %v602 = vadd.f32 %v589, 1.0
    %v603 = vadd.f32 %v591, 1.0
    %v604 = vadd.f32 %v593, 1.0
    %v605 = vadd.f32 %v595, 1.0
    %v606 = vadd.f32 %v597, 1.0
    %v607 = vadd.f32 %v599, 1.0
    %v608 = vadd.f32 %v601, 1.0
    %v609 = vrcp.pop %v602
    %v610 = vmul.f32 %v602, %v609
    %v611 = vsub.f32 1.0, %v610
    %v612 = vmul.f32 %v609, %v611
    %v613 = vadd.f32 %v609, %v612
    %vm614 = vweird.f32 %v602
    %vm615 = vweird.f32 %v609
    %vm616 = vmor %vm614, %vm615
    %v617 = vsel %vm616, %v609, %v613
    %v618 = vand.u32 2147483647, %v602
    %vm619 = vcmp.eq.f32.partialorder %v618, 8.507059e+37
    %v620 = vand.u32 %v602, 2147483648
    %v621 = vor.u32 1.1754944e-38, %v620
    %v622 = vsel %vm619, %v621, %v617
    %v623 = vmul.f32 1.0, %v622
    %v624 = vrcp.pop %v603
    %v625 = vmul.f32 %v603, %v624
    %v626 = vsub.f32 1.0, %v625
    %v627 = vmul.f32 %v624, %v626
    %v628 = vadd.f32 %v624, %v627
    %vm629 = vweird.f32 %v603
    %vm630 = vweird.f32 %v624
    %vm631 = vmor %vm629, %vm630
    %v632 = vsel %vm631, %v624, %v628
    %v633 = vand.u32 2147483647, %v603
    %vm634 = vcmp.eq.f32.partialorder %v633, 8.507059e+37
    %v635 = vand.u32 %v603, 2147483648
    %v636 = vor.u32 1.1754944e-38, %v635
    %v637 = vsel %vm634, %v636, %v632
    %v638 = vmul.f32 1.0, %v637
    %v639 = vrcp.pop %v604
    %v640 = vmul.f32 %v604, %v639
    %v641 = vsub.f32 1.0, %v640
    %v642 = vmul.f32 %v639, %v641
    %v643 = vadd.f32 %v639, %v642
    %vm644 = vweird.f32 %v604
    %vm645 = vweird.f32 %v639
    %vm646 = vmor %vm644, %vm645
    %v647 = vsel %vm646, %v639, %v643
    %v648 = vand.u32 2147483647, %v604
    %vm649 = vcmp.eq.f32.partialorder %v648, 8.507059e+37
    %v650 = vand.u32 %v604, 2147483648
    %v651 = vor.u32 1.1754944e-38, %v650
    %v652 = vsel %vm649, %v651, %v647
    %v653 = vmul.f32 1.0, %v652
    %v654 = vrcp.pop %v605
    %v655 = vmul.f32 %v605, %v654
    %v656 = vsub.f32 1.0, %v655
    %v657 = vmul.f32 %v654, %v656
    %v658 = vadd.f32 %v654, %v657
    %vm659 = vweird.f32 %v605
    %vm660 = vweird.f32 %v654
    %vm661 = vmor %vm659, %vm660
    %v662 = vsel %vm661, %v654, %v658
    %v663 = vand.u32 2147483647, %v605
    %vm664 = vcmp.eq.f32.partialorder %v663, 8.507059e+37
    %v665 = vand.u32 %v605, 2147483648
    %v666 = vor.u32 1.1754944e-38, %v665
    %v667 = vsel %vm664, %v666, %v662
    %v668 = vmul.f32 1.0, %v667
    %v669 = vrcp.pop %v606
    %v670 = vmul.f32 %v606, %v669
    %v671 = vsub.f32 1.0, %v670
    %v672 = vmul.f32 %v669, %v671
    %v673 = vadd.f32 %v669, %v672
    %vm674 = vweird.f32 %v606
    %vm675 = vweird.f32 %v669
    %vm676 = vmor %vm674, %vm675
    %v677 = vsel %vm676, %v669, %v673
    %v678 = vand.u32 2147483647, %v606
    %vm679 = vcmp.eq.f32.partialorder %v678, 8.507059e+37
    %v680 = vand.u32 %v606, 2147483648
    %v681 = vor.u32 1.1754944e-38, %v680
    %v682 = vsel %vm679, %v681, %v677
    %v683 = vmul.f32 1.0, %v682
    %v684 = vrcp.pop %v607
    %v685 = vmul.f32 %v607, %v684
    %v686 = vsub.f32 1.0, %v685
    %v687 = vmul.f32 %v684, %v686
    %v688 = vadd.f32 %v684, %v687
    %vm689 = vweird.f32 %v607
    %vm690 = vweird.f32 %v684
    %vm691 = vmor %vm689, %vm690
    %v692 = vsel %vm691, %v684, %v688
    %v693 = vand.u32 2147483647, %v607
    %vm694 = vcmp.eq.f32.partialorder %v693, 8.507059e+37
    %v695 = vand.u32 %v607, 2147483648
    %v696 = vor.u32 1.1754944e-38, %v695
    %v697 = vsel %vm694, %v696, %v692
    %v698 = vmul.f32 1.0, %v697
    %v699 = vrcp.pop %v608
    %v700 = vmul.f32 %v608, %v699
    %v701 = vsub.f32 1.0, %v700
    %v702 = vmul.f32 %v699, %v701
    %v703 = vadd.f32 %v699, %v702
    %vm704 = vweird.f32 %v608
    %vm705 = vweird.f32 %v699
    %vm706 = vmor %vm704, %vm705
    %v707 = vsel %vm706, %v699, %v703
    %v708 = vand.u32 2147483647, %v608
    %vm709 = vcmp.eq.f32.partialorder %v708, 8.507059e+37
    %v710 = vand.u32 %v608, 2147483648
    %v711 = vor.u32 1.1754944e-38, %v710
    %v712 = vsel %vm709, %v711, %v707
    %v713 = vmul.f32 1.0, %v712
    %v714 = vld [vmem:[%s7] sm:$0xff]
    %v715 = vld [vmem:[%s7 + $0x8] sm:$0xff]
    %v716 = vld [vmem:[%s7 + $0x10] sm:$0xff]
    %v717 = vld [vmem:[%s7 + $0x18] sm:$0xff]
    %v718 = vld [vmem:[%s7 + $0x20] sm:$0xf]
    %v719 = vld [vmem:[%s7 + $0x28] sm:$0xf]
    %v720 = vld [vmem:[%s8] sm:$0x3]
    %v722 = vperm.slane %v720, 0
    %v723 = vperm.slane %v720, 1
    %v727 = vsel %vm314, %v623, 0
    %v730 = vsel %vm314, %v638, 0
    %v733 = vsel %vm314, %v653, 0
    %v736 = vsel %vm314, %v668, 0
    %v739 = vsel %vm314, %v683, 0
    %v742 = vsel %vm314, %v698, 0
    %v745 = vsel %vm314, %v713, 0
    %v748 = vsel %vm336, %v718, 0
    %v751 = vsel %vm336, %v719, 0
    %753 = vmatpush.msra.mxu0 0.0
    %754 = vmatpush.msra.mxu0 0.0
    %755 = vmatpush.msra.mxu0 0.0
    %756 = vmatpush.msra.mxu0 0.0
    %757 = vmatpush.msra.mxu0 0.0
    %758 = vmatpush.msra.mxu0 0.0
    %759 = vmatpush.msra.mxu0 0.0
    %760 = vmatpush.msra.mxu0 0.0
    %761 = vmatpush.msra.mxu0 0.0
    %762 = vmatpush.msra.mxu0 0.0
    %763 = vmatpush.msra.mxu0 0.0
    %764 = vmatpush.msra.mxu0 0.0
    %765 = vmatpush.msra.mxu0 0.0
    %766 = vmatpush.msra.mxu0 %v748
    %767 = vmatpush.msra.mxu0 %v716
    %768 = vmatpush.msra.mxu0 %v714
    %769 = vmatmul.f32.gmra.mxu0 %v727
    %v770 = vpop.f32.mrf.mxu0
    %v771 = vadd.f32 %v722, %v770
    %772 = vmatmul.f32.gmra.mxu0 %v730
    %v773 = vpop.f32.mrf.mxu0
    %v774 = vadd.f32 %v722, %v773
    %775 = vmatmul.f32.gmra.mxu0 %v733
    %v776 = vpop.f32.mrf.mxu0
    %v777 = vadd.f32 %v722, %v776
    %778 = vmatmul.f32.gmra.mxu0 %v736
    %v779 = vpop.f32.mrf.mxu0
    %v780 = vadd.f32 %v722, %v779
    %781 = vmatmul.f32.gmra.mxu0 %v739
    %v782 = vpop.f32.mrf.mxu0
    %v783 = vadd.f32 %v722, %v782
    %784 = vmatmul.f32.gmra.mxu0 %v742
    %v785 = vpop.f32.mrf.mxu0
    %v786 = vadd.f32 %v722, %v785
    %787 = vmatmul.f32.gmra.mxu0 %v745
    %v788 = vpop.f32.mrf.mxu0
    %v789 = vadd.f32 %v722, %v788
    %790 = vdwg.mxu0
    %791 = vmatpush.msra.mxu0 0.0
    %792 = vmatpush.msra.mxu0 0.0
    %793 = vmatpush.msra.mxu0 0.0
    %794 = vmatpush.msra.mxu0 0.0
    %795 = vmatpush.msra.mxu0 0.0
    %796 = vmatpush.msra.mxu0 0.0
    %797 = vmatpush.msra.mxu0 0.0
    %798 = vmatpush.msra.mxu0 0.0
    %799 = vmatpush.msra.mxu0 0.0
    %800 = vmatpush.msra.mxu0 0.0
    %801 = vmatpush.msra.mxu0 0.0
    %802 = vmatpush.msra.mxu0 0.0
    %803 = vmatpush.msra.mxu0 0.0
    %804 = vmatpush.msra.mxu0 %v751
    %805 = vmatpush.msra.mxu0 %v717
    %806 = vmatpush.msra.mxu0 %v715
    %807 = vmatmul.f32.gmra.mxu0 %v727
    %v808 = vpop.f32.mrf.mxu0
    %v809 = vadd.f32 %v723, %v808
    %810 = vmatmul.f32.gmra.mxu0 %v730
    %v811 = vpop.f32.mrf.mxu0
    %v812 = vadd.f32 %v723, %v811
    %813 = vmatmul.f32.gmra.mxu0 %v733
    %v814 = vpop.f32.mrf.mxu0
    %v815 = vadd.f32 %v723, %v814
    %816 = vmatmul.f32.gmra.mxu0 %v736
    %v817 = vpop.f32.mrf.mxu0
    %v818 = vadd.f32 %v723, %v817
    %819 = vmatmul.f32.gmra.mxu0 %v739
    %v820 = vpop.f32.mrf.mxu0
    %v821 = vadd.f32 %v723, %v820
    %822 = vmatmul.f32.gmra.mxu0 %v742
    %v823 = vpop.f32.mrf.mxu0
    %v824 = vadd.f32 %v723, %v823
    %825 = vmatmul.f32.gmra.mxu0 %v745
    %v826 = vpop.f32.mrf.mxu0
    %v827 = vadd.f32 %v723, %v826
    %828 = vdwg.mxu0
    %829 = vst [vmem:[#allocation2] sm:$0xff] %v771
    %830 = vst.msk [vmem:[#allocation2 + $0x8] sm:$0xff] %vm76, %v809
    %831 = vst [vmem:[#allocation2 + $0x10] sm:$0xff] %v774
    %832 = vst.msk [vmem:[#allocation2 + $0x18] sm:$0xff] %vm76, %v812
    %833 = vst [vmem:[#allocation2 + $0x20] sm:$0xff] %v777
    %834 = vst.msk [vmem:[#allocation2 + $0x28] sm:$0xff] %vm76, %v815
    %835 = vst [vmem:[#allocation2 + $0x30] sm:$0xff] %v780
    %836 = vst.msk [vmem:[#allocation2 + $0x38] sm:$0xff] %vm76, %v818
    %837 = vst [vmem:[#allocation2 + $0x40] sm:$0xff] %v783
    %838 = vst.msk [vmem:[#allocation2 + $0x48] sm:$0xff] %vm76, %v821
    %839 = vst [vmem:[#allocation2 + $0x50] sm:$0xff] %v786
    %840 = vst.msk [vmem:[#allocation2 + $0x58] sm:$0xff] %vm76, %v824
    %841 = vst [vmem:[#allocation2 + $0x60] sm:$0x3] %v789
    %vm842 = vcmask 582656
    %843 = vst.msk [vmem:[#allocation2 + $0x68] sm:$0x3] %vm842, %v827
    // Predicated region
    $region38: #{sae_forward.1} parent=1 // pred_check
      _
    $region39: #{sae_forward.1} parent=1 // pred_check_branch
      %845 = sbr.rel (0) target = $region41
    $region40: #{sae_forward.1} parent=1 // pred_region
      %847 = vsyncadd [#allocation3], 0
      %s848 = sshll.u32 [#allocation2], 4
      %s849 = int_to_ptr.vmem [resolvable:$true] %s848
      %s850 = sshll.u32 %s9, 4
      %s851 = int_to_ptr.hbm [resolvable:$true] %s850
      %856 = dma.vmem_to_hbm [thread:$0]  %s849, 1792, %s851, [#allocation3], 256, 256, 16
    $region41: #{sae_forward.1} parent=1 // pred_fallthru
      _
    // Predicated region
    $region42: #{sae_forward.1} parent=1 // pred_check
      _
    $region43: #{sae_forward.1} parent=1 // pred_check_branch
      %858 = sbr.rel (0) target = $region45
    $region44: #{sae_forward.1} parent=1 // pred_region
      %860 = dma.done [#allocation3], 1792
    $region45: #{sae_forward.1} parent=1 // pred_fallthru
      _
    %861 = vsyncpa [#allocation3], 1

</llo_original>
